<compile_context>
chip_gen: v6e
topology: v6e:2x2x1
jax: 0.10.0
libtpu: 0.0.40
codegen_flags: <defaults>
</compile_context>

<pallas_src>
import functools
import math

import numpy as np
import jax
import jax.numpy as jnp
from jax import lax
from jax.experimental import pallas as pl
from jax.experimental.pallas import tpu as pltpu


def _cdiv(a, b):
    return -(-a // b)


def _round_up(a, b):
    return _cdiv(a, b) * b


# Explicit scoped-VMEM limit: matches the v6e/v7x default (32 MiB) and raises
# v5e's 16 MiB default so the larger tiles below always fit.
_VMEM_LIMIT_BYTES = 32 * 1024 * 1024


# ---------------------------------------------------------------------------
# Kernel 1: scene contraction (elementwise, lane-dense slabs, tiled over rows)
# ---------------------------------------------------------------------------
def _contract_mc_kernel(m_ref, c_ref, mo_ref, co_ref, *, r, inv_2r, inv_4r2):
    m = m_ref[...].astype(jnp.float32)
    c = c_ref[...].astype(jnp.float32)
    mo_ref[...] = ((m + r) * inv_2r).astype(mo_ref.dtype)
    co_ref[...] = (c * inv_4r2).astype(co_ref.dtype)


def _contract_m_kernel(m_ref, mo_ref, *, r, inv_2r):
    m = m_ref[...].astype(jnp.float32)
    mo_ref[...] = ((m + r) * inv_2r).astype(mo_ref.dtype)


def contraction(means, covs=None, *, aabb, max_tile_rows=1024):
    """means: (N, 3), covs: (N, 3, 3) or None, aabb: static length-6 sequence.

    max_tile_rows=1024 (~4 MiB in+out per step with covs) is safe everywhere;
    2048 is a further ~5% on v6e/v7x (still under the explicit 32 MiB limit).
    """
    aabb = np.asarray(aabb, dtype=np.float32)              # static config
    size = aabb[3:] - aabb[:3]
    assert abs(size[0] - size[1]) < 1e-6 and abs(size[0] - size[2]) < 1e-6, \
        "Current implementation only supports cube aabb"
    r = float(size[0]) / 2.0
    inv_2r = 1.0 / (2.0 * r)
    inv_4r2 = 1.0 / (4.0 * r * r)

    n = means.shape[0]
    total_m = n * 3
    m_flat = means.reshape(-1)

    # Lane-dense slab.  Skip the pad (a full extra HBM pass) whenever the flat
    # size is already a multiple of 128 (e.g. power-of-2 ray counts).
    if total_m % 128 == 0:
        rows = total_m // 128
        m2d = m_flat.reshape(rows, 128)
        padded = False
    else:
        rows = _round_up(_cdiv(total_m, 128), 8)
        m2d = jnp.pad(m_flat, (0, rows * 128 - total_m)).reshape(rows, 128)
        padded = True

    # Tile: biggest that fits, but keep >=2 grid steps (v7x megacore) when possible;
    # never round `rows` up to a tile multiple (cdiv grid handles the edge block).
    if rows % 8 == 0:
        tile_rows = min(max_tile_rows, max(8, _round_up(_cdiv(rows, 2), 8)))
    else:
        tile_rows = rows if rows <= max_tile_rows else max_tile_rows
    grid = (_cdiv(rows, tile_rows),)

    cparams = pltpu.CompilerParams(
        dimension_semantics=("parallel",),
        vmem_limit_bytes=_VMEM_LIMIT_BYTES,
    )

    if covs is None:
        kern = functools.partial(_contract_m_kernel, r=r, inv_2r=inv_2r)
        m_out = pl.pallas_call(
            kern,
            grid=grid,
            in_specs=[pl.BlockSpec((tile_rows, 128), lambda i: (i, 0))],
            out_specs=pl.BlockSpec((tile_rows, 128), lambda i: (i, 0)),
            out_shape=jax.ShapeDtypeStruct((rows, 128), means.dtype),
            compiler_params=cparams,
        )(m2d)
        m_out = m_out.reshape(-1)
        if padded:
            m_out = m_out[:total_m]
        return m_out.reshape(n, 3)

    total_c = n * 9
    c_flat = covs.reshape(-1)
    # total_m == rows*128  =>  total_c == rows*384, so covs reuse the same row count.
    if padded:
        c2d = jnp.pad(c_flat, (0, rows * 384 - total_c)).reshape(rows, 384)
    else:
        c2d = c_flat.reshape(rows, 384)

    kern = functools.partial(_contract_mc_kernel, r=r, inv_2r=inv_2r, inv_4r2=inv_4r2)
    m_out, c_out = pl.pallas_call(
        kern,
        grid=grid,
        in_specs=[
            pl.BlockSpec((tile_rows, 128), lambda i: (i, 0)),
            pl.BlockSpec((tile_rows, 384), lambda i: (i, 0)),
        ],
        out_specs=(
            pl.BlockSpec((tile_rows, 128), lambda i: (i, 0)),
            pl.BlockSpec((tile_rows, 384), lambda i: (i, 0)),
        ),
        out_shape=(
            jax.ShapeDtypeStruct((rows, 128), means.dtype),
            jax.ShapeDtypeStruct((rows, 384), covs.dtype),
        ),
        compiler_params=cparams,
    )(m2d, c2d)

    m_out = m_out.reshape(-1)
    c_out = c_out.reshape(-1)
    if padded:
        m_out = m_out[:total_m]
        c_out = c_out[:total_c]
    return m_out.reshape(n, 3), c_out.reshape(n, 3, 3)


# ---------------------------------------------------------------------------
# Kernel 2: compute_loss (smooth_l1) as a two-level grid reduction
#   Input: one packed (8, N) slab, rows = [rgb0,rgb1,rgb2, tgt0,tgt1,tgt2, alpha, lm]
#   Grid : (num_splits "parallel", blocks_per_split "arbitrary")
#   Each split accumulates into an (8, tile_n) f32 VMEM accumulator
#   (rows 0..2: sum of smooth_l1*w per channel, row 3: sum of w), reduces it to
#   a scalar only at its last step, and writes per-split (num, den) partials.
#   Final num/den sum + divide happens in JAX (tiny).
# ---------------------------------------------------------------------------
def _loss_kernel(data_ref, num_ref, den_ref, acc_ref, *, n_rays, mask_from):
    p = pl.program_id(0)                 # split index ("parallel" -> one per core on v7x)
    i = pl.program_id(1)                 # block index within split ("arbitrary")
    nblk = pl.num_programs(1)
    blk = p * nblk + i                   # global column-block index
    tile_n = data_ref.shape[-1]

    @pl.when(i == 0)
    def _init():
        acc_ref[...] = jnp.zeros_like(acc_ref)

    data = data_ref[...].astype(jnp.float32)          # (8, tile_n)
    rgb, tgt = data[0:3, :], data[3:6, :]
    alpha, lm = data[6:7, :], data[7:8, :]

    def accumulate(mask_cols):
        d = rgb - tgt                                  # (3, tile_n)
        ad = jnp.abs(d)
        sl1 = jnp.where(ad < 1.0, 0.5 * d * d, ad - 0.5)   # smooth_l1, beta = 1.0
        w = jnp.where(alpha > 0.0, lm, 0.0)            # alive-ray weight, (1, tile_n)
        if mask_cols:
            # Edge / redundant block: kill lanes past the real ray count
            # (also protects against NaN/Inf garbage in the padded load).
            col = blk * tile_n + lax.broadcasted_iota(jnp.int32, (1, tile_n), 1)
            valid = col < n_rays
            w = jnp.where(valid, w, 0.0)
            weighted = jnp.where(valid, sl1 * w, 0.0)
        else:
            weighted = sl1 * w
        acc_ref[0:3, :] += weighted                    # lane-parallel VPU adds only
        acc_ref[3:4, :] += w

    if mask_from is None:
        # Static: every block is fully in range -> no masking code at all.
        accumulate(False)
    else:
        @pl.when(blk < mask_from)
        def _interior():
            accumulate(False)

        @pl.when(blk >= mask_from)
        def _edge():
            accumulate(True)

    @pl.when(i == nblk - 1)
    def _finalize():
        num = jnp.sum(acc_ref[0:3, :])                 # single cross-lane reduce / split
        den = jnp.sum(acc_ref[3:4, :])
        num_ref[...] = jnp.broadcast_to(num, num_ref.shape)
        den_ref[...] = jnp.broadcast_to(den, den_ref.shape)


def compute_loss(rgb, target_rgb, alpha, loss_multi, *, max_tile_n=131072, num_splits=2):
    """rgb/target_rgb: (N, 3), alpha: (N, 1), loss_multi: (N, 1). Returns scalar.

    max_tile_n=131072 -> 4 MiB of packed input per grid step (amortizes the
    ~0.35 us per-step overhead on v7x); total VMEM ~ 8 MiB (2x buffered input)
    + 4 MiB accumulator, under the explicit 32 MiB limit on all chips.
    num_splits=2 shards the reduction over both v7x TensorCores (no-op on 1-TC chips).
    """
    n = rgb.shape[0]
    # One packed, lane-dense (8, N) slab: a single fused XLA repack instead of
    # four separate transposes, and one DMA per grid step in the kernel.
    packed = jnp.concatenate(
        [rgb.reshape(n, 3), target_rgb.reshape(n, 3),
         alpha.reshape(n, 1), loss_multi.reshape(n, 1)], axis=-1).T   # (8, N)

    tile_n = min(max_tile_n, _round_up(n, 128))
    n_blocks = _cdiv(n, tile_n)
    splits = min(num_splits, n_blocks)
    bps = _cdiv(n_blocks, splits)                     # blocks per split
    covered = splits * bps                            # >= n_blocks (extras are clamped)

    # First global block index whose columns may fall outside [0, n); None => never.
    if n % tile_n == 0 and covered == n_blocks:
        mask_from = None
    else:
        mask_from = (n_blocks - 1) if (n % tile_n) else n_blocks

    kern = functools.partial(_loss_kernel, n_rays=n, mask_from=mask_from)
    num_out, den_out = pl.pallas_call(
        kern,
        grid=(splits, bps),
        in_specs=[pl.BlockSpec(
            (8, tile_n),
            # Clamp redundant trailing blocks onto the last real block (their
            # columns are fully masked in-kernel, so they contribute zero).
            lambda p, i: (0, jnp.minimum(p * bps + i, n_blocks - 1)))],
        out_specs=(
            pl.BlockSpec((1, 8, 128), lambda p, i: (p, 0, 0)),
            pl.BlockSpec((1, 8, 128), lambda p, i: (p, 0, 0)),
        ),
        out_shape=(
            jax.ShapeDtypeStruct((splits, 8, 128), jnp.float32),
            jax.ShapeDtypeStruct((splits, 8, 128), jnp.float32),
        ),
        scratch_shapes=[pltpu.VMEM((8, tile_n), jnp.float32)],
        compiler_params=pltpu.CompilerParams(
            dimension_semantics=("parallel", "arbitrary"),
            vmem_limit_bytes=_VMEM_LIMIT_BYTES),
    )(packed)

    # Final cross-split combine (tiny). NaN if no rays are alive — matches the
    # PyTorch reference behaviour.
    return jnp.sum(num_out[:, 0, 0]) / jnp.sum(den_out[:, 0, 0])


# ---------------------------------------------------------------------------
# Pure-JAX references for verification
# ---------------------------------------------------------------------------
def _contraction_ref(means, covs, aabb):
    aabb = np.asarray(aabb, dtype=np.float32)
    r = float(aabb[3] - aabb[0]) / 2.0
    if covs is None:
        return (means + r) / (2 * r)
    return (means + r) / (2 * r), covs / (4 * r * r)


def _loss_ref(rgb, target_rgb, alpha, loss_multi):
    d = rgb - target_rgb
    ad = jnp.abs(d)
    sl1 = jnp.where(ad < 1.0, 0.5 * d * d, ad - 0.5)
    alive = (alpha[:, 0] > 0.0).astype(jnp.float32)
    w = alive[:, None] * loss_multi
    return jnp.sum(sl1 * w) / jnp.sum(w)


if __name__ == "__main__":
    key = jax.random.PRNGKey(0)
    k1, k2, k3, k4, k5, k6, k7, k8 = jax.random.split(key, 8)

    # RFModel static config (as in the module ctor): cube aabb.
    aabb = [-1.0, -1.0, -1.0, 1.0, 1.0, 1.0]
    samples_per_ray = 1024
    render_step_size = (max(aabb[3] - aabb[0], aabb[4] - aabb[1], aabb[5] - aabb[2])
                        * math.sqrt(3) / samples_per_ray)  # static float, unused by kernels

    # --- contraction: no-pad path (N*3 % 128 == 0) and pad path ---
    N1 = 128
    means1 = jax.random.uniform(k1, (N1, 3), jnp.float32, -1.0, 1.0)
    covs1 = jax.random.uniform(k2, (N1, 3, 3), jnp.float32, 0.0, 0.1)
    N2 = 1000
    means2 = jax.random.uniform(k7, (N2, 3), jnp.float32, -1.0, 1.0)
    covs2 = jax.random.uniform(k8, (N2, 3, 3), jnp.float32, 0.0, 0.1)

    m1_out, c1_out = contraction(means1, covs1, aabb=aabb)
    m1_only = contraction(means1, None, aabb=aabb)
    m2_out, c2_out = contraction(means2, covs2, aabb=aabb)

    # --- loss: single-block path (default tile) and multi-block / 2-split path ---
    Nl = 600
    rgb = jax.random.uniform(k3, (Nl, 3), jnp.float32, 0.0, 1.0)
    target_rgb = jax.random.uniform(k4, (Nl, 3), jnp.float32, 0.0, 1.0)
    alpha = jnp.where(jax.random.uniform(k5, (Nl, 1)) > 0.3,
                      jax.random.uniform(k5, (Nl, 1), jnp.float32, 0.1, 1.0),
                      jnp.zeros((Nl, 1), jnp.float32))
    loss_multi = jax.random.uniform(k6, (Nl, 1), jnp.float32, 0.5, 2.0)

    loss_a = compute_loss(rgb, target_rgb, alpha, loss_multi)
    loss_b = compute_loss(rgb, target_rgb, alpha, loss_multi, max_tile_n=256)

    jax.block_until_ready((m1_out, c1_out, m1_only, m2_out, c2_out, loss_a, loss_b))

    # --- verify against pure-JAX references ---
    m1_ref, c1_ref = _contraction_ref(means1, covs1, aabb)
    m2_ref, c2_ref = _contraction_ref(means2, covs2, aabb)
    l_ref = _loss_ref(rgb, target_rgb, alpha, loss_multi)

    assert jnp.allclose(m1_out, m1_ref, atol=1e-5), "contraction means mismatch (N=128)"
    assert jnp.allclose(m1_only, m1_ref, atol=1e-5), "contraction means-only mismatch"
    assert jnp.allclose(c1_out, c1_ref, atol=1e-5), "contraction covs mismatch (N=128)"
    assert jnp.allclose(m2_out, m2_ref, atol=1e-5), "contraction means mismatch (N=1000)"
    assert jnp.allclose(c2_out, c2_ref, atol=1e-5), "contraction covs mismatch (N=1000)"
    assert jnp.allclose(loss_a, l_ref, atol=1e-5, rtol=1e-5), "loss mismatch (1-block)"
    assert jnp.allclose(loss_b, l_ref, atol=1e-5, rtol=1e-5), "loss mismatch (2-split)"

    # TODO(synk): RFModel.forward / get_optimizer are abstract (NotImplementedError);
    # PSNR/SSIM/LPIPS metrics require external pretrained nets and are not kernelized.
    print("KERNEL_OK")
</pallas_src>

<mosaic_0001>
module attributes {stable_mosaic.version = 11 : i64} {
  func.func @_contract_mc_kernel(%arg0: i32, %arg1: memref<3x128xf32, #tpu.memory_space<vmem>>, %arg2: memref<3x384xf32, #tpu.memory_space<vmem>>, %arg3: memref<3x128xf32, #tpu.memory_space<vmem>>, %arg4: memref<3x384xf32, #tpu.memory_space<vmem>>) attributes {dimension_semantics = [#tpu.dimension_semantics<parallel>], iteration_bounds = array<i64: 1>, scalar_prefetch = 0 : i64, scratch_operands = 0 : i64, tpu.core_type = #tpu.core_type<tc>, window_params = [{transform_indices = @transform_0, window_bounds = array<i64: 3, 128>}, {transform_indices = @transform_1, window_bounds = array<i64: 3, 384>}, {transform_indices = @transform_2, window_bounds = array<i64: 3, 128>}, {transform_indices = @transform_3, window_bounds = array<i64: 3, 384>}]} {
    %c0 = arith.constant 0 : index
    %c0_0 = arith.constant 0 : index
    %0 = vector.load %arg1[%c0, %c0_0] : memref<3x128xf32, #tpu.memory_space<vmem>>, vector<3x128xf32>
    %c0_1 = arith.constant 0 : index
    %c0_2 = arith.constant 0 : index
    %1 = vector.load %arg2[%c0_1, %c0_2] : memref<3x384xf32, #tpu.memory_space<vmem>>, vector<3x384xf32>
    %cst = arith.constant 1.000000e+00 : f32
    %2 = vector.broadcast %cst : f32 to vector<3x128xf32>
    %3 = arith.addf %0, %2 : vector<3x128xf32>
    %cst_3 = arith.constant 5.000000e-01 : f32
    %4 = vector.broadcast %cst_3 : f32 to vector<3x128xf32>
    %5 = arith.mulf %3, %4 : vector<3x128xf32>
    %c0_4 = arith.constant 0 : index
    %c0_5 = arith.constant 0 : index
    %6 = vector.load %arg3[%c0_4, %c0_5] : memref<3x128xf32, #tpu.memory_space<vmem>>, vector<3x128xf32>
    tpu.vector_store %arg3[%c0_4, %c0_5], %5 {strides = array<i32>} : memref<3x128xf32, #tpu.memory_space<vmem>>, vector<3x128xf32>,
    %cst_6 = arith.constant 2.500000e-01 : f32
    %7 = vector.broadcast %cst_6 : f32 to vector<3x384xf32>
    %8 = arith.mulf %1, %7 : vector<3x384xf32>
    %c0_7 = arith.constant 0 : index
    %c0_8 = arith.constant 0 : index
    %9 = vector.load %arg4[%c0_7, %c0_8] : memref<3x384xf32, #tpu.memory_space<vmem>>, vector<3x384xf32>
    tpu.vector_store %arg4[%c0_7, %c0_8], %8 {strides = array<i32>} : memref<3x384xf32, #tpu.memory_space<vmem>>, vector<3x384xf32>,
    return
  }
  func.func @transform_0(%arg0: i32) -> (i32, i32) {
    %c0_i32 = arith.constant 0 : i32
    %c0_i32_0 = arith.constant 0 : i32
    return %arg0, %c0_i32 : i32, i32
  }
  func.func @transform_1(%arg0: i32) -> (i32, i32) {
    %c0_i32 = arith.constant 0 : i32
    %c0_i32_0 = arith.constant 0 : i32
    return %arg0, %c0_i32 : i32, i32
  }
  func.func @transform_2(%arg0: i32) -> (i32, i32) {
    %c0_i32 = arith.constant 0 : i32
    %c0_i32_0 = arith.constant 0 : i32
    return %arg0, %c0_i32 : i32, i32
  }
  func.func @transform_3(%arg0: i32) -> (i32, i32) {
    %c0_i32 = arith.constant 0 : i32
    %c0_i32_0 = arith.constant 0 : i32
    return %arg0, %c0_i32 : i32, i32
  }
}

</mosaic_0001>

<llo_original>
// kernel: tpu_custom_call.1
$region0: #{tpu_custom_call.1}
  #allocation0 [shape = 'u32[]', space=smem, size = 0x4, offset = 0x4, fixed_abs, tag = 'smem constant byte address 0x4 - core index']
  #allocation1 [shape = 'u32[144,128]{1,0:T(1,128)}', space=vmem, size = 0x12000, scoped, tag = 'internal scratch']
  %s0 = inlined_call_operand.hbm [shape: f32[3,128], index: 0, kind: input, shape index: {}]
  %s1 = inlined_call_operand.hbm [shape: f32[3,384], index: 1, kind: input, shape index: {}]
  %s2 = inlined_call_operand.hbm [shape: f32[3,128], index: 2, kind: output, shape index: {0}]
  %s3 = inlined_call_operand.hbm [shape: f32[3,384], index: 3, kind: output, shape index: {1}]
  %4 = xla_tuple %s2, %s3
  %s5 = sld [smem:[#allocation0]]
  $region34: #{tpu_custom_call.1} parent=0
    _
  %s7 = ssub.s32 1, %s5
  %s8 = scalar_select 0, %s7, %s5
  $region1: #{tpu_custom_call.1} parent=0
    #allocation2 [shape = 'u8[2048]{0}', space=vmem, size = 0x800, scoped, tag = 'input window, operand 0, single buffered']
    #allocation3 [shape = 's32[1]{0}', space=sflag, size = 0x4, scoped, tag = 'scoped memory for tpu_custom_call.1']
    #allocation4 [shape = 's32[1]{0}', space=sflag, size = 0x4, scoped, tag = 'scoped memory for tpu_custom_call.1']
    #allocation5 [shape = 'u8[6144]{0}', space=vmem, size = 0x1800, scoped, tag = 'input window, operand 1, single buffered']
    #allocation6 [shape = 's32[1]{0}', space=sflag, size = 0x4, scoped, tag = 'scoped memory for tpu_custom_call.1']
    #allocation7 [shape = 'u8[2048]{0}', space=vmem, size = 0x800, scoped, tag = 'output window, operand 0, single buffered']
    #allocation8 [shape = 'u8[6144]{0}', space=vmem, size = 0x1800, scoped, tag = 'output window, operand 1, single buffered']
    #allocation9 [shape = 's32[1]{0}', space=sflag, size = 0x4, scoped, tag = 'scoped memory for tpu_custom_call.1']
    %9 = vsyncpa [#allocation3], 0
    %10 = vsyncpa [#allocation6], 0
    %11 = vsyncpa [#allocation4], 0
    %12 = vsyncpa [#allocation9], 0
    // Predicated region
    $region2: #{tpu_custom_call.1} parent=1 // pred_check
      _
    $region3: #{tpu_custom_call.1} parent=1 // pred_check_branch
      %14 = sbr.rel (0) target = $region5
    $region4: #{tpu_custom_call.1} parent=1 // pred_region
      %s16 = ssub.s32 64, 64
      %17 = vsyncadd [#allocation3], %s16
      %s19 = sshll.u32 [#allocation2], 4
      %s20 = int_to_ptr.vmem [resolvable:$true] %s19
      %22 = dma.hbm_to_vmem [thread:$0]  %s0, 64, %s20, [#allocation3]
    $region5: #{tpu_custom_call.1} parent=1 // pred_fallthru
      _
    // Predicated region
    $region6: #{tpu_custom_call.1} parent=1 // pred_check
      _
    $region7: #{tpu_custom_call.1} parent=1 // pred_check_branch
      %24 = sbr.rel (0) target = $region9
    $region8: #{tpu_custom_call.1} parent=1 // pred_region
      %s26 = ssub.s32 192, 192
      %27 = vsyncadd [#allocation6], %s26
      %s29 = sshll.u32 [#allocation5], 4
      %s30 = int_to_ptr.vmem [resolvable:$true] %s29
      %32 = dma.hbm_to_vmem [thread:$0]  %s1, 192, %s30, [#allocation6]
    $region9: #{tpu_custom_call.1} parent=1 // pred_fallthru
      _
    // Predicated region
    $region10: #{tpu_custom_call.1} parent=1 // pred_check
      _
    $region11: #{tpu_custom_call.1} parent=1 // pred_check_branch
      %34 = sbr.rel (0) target = $region13
    $region12: #{tpu_custom_call.1} parent=1 // pred_region
      %35 = dma.done [#allocation3], 64
    $region13: #{tpu_custom_call.1} parent=1 // pred_fallthru
      _
    // Predicated region
    $region14: #{tpu_custom_call.1} parent=1 // pred_check
      _
    $region15: #{tpu_custom_call.1} parent=1 // pred_check_branch
      %37 = sbr.rel (0) target = $region17
    $region16: #{tpu_custom_call.1} parent=1 // pred_region
      %38 = dma.done [#allocation6], 192
    $region17: #{tpu_custom_call.1} parent=1 // pred_fallthru
      _
    %v39 = vld [vmem:[#allocation2] sm:$0x7]
    %v40 = vld [vmem:[#allocation5] sm:$0x77]
    %v41 = vld [vmem:[#allocation5 + $0x8] sm:$0x7]
    %v42 = vadd.f32 %v39, 1.0
    %v43 = vmul.f32 %v42, 0.5
    %44 = vst [vmem:[#allocation7] sm:$0x7] %v43
    %v45 = vmul.f32 %v40, 0.25
    %v46 = vmul.f32 %v41, 0.25
    %47 = vst [vmem:[#allocation8] sm:$0x77] %v45
    %48 = vst [vmem:[#allocation8 + $0x8] sm:$0x7] %v46
    // Predicated region
    $region18: #{tpu_custom_call.1} parent=1 // pred_check
      _
    $region19: #{tpu_custom_call.1} parent=1 // pred_check_branch
      %50 = sbr.rel (0) target = $region21
    $region20: #{tpu_custom_call.1} parent=1 // pred_region
      %s52 = ssub.s32 64, 64
      %53 = vsyncadd [#allocation4], %s52
      %s55 = sshll.u32 [#allocation7], 4
      %s56 = int_to_ptr.vmem [resolvable:$true] %s55
      %58 = dma.vmem_to_hbm [thread:$0]  %s56, 64, %s2, [#allocation4]
    $region21: #{tpu_custom_call.1} parent=1 // pred_fallthru
      _
    // Predicated region
    $region22: #{tpu_custom_call.1} parent=1 // pred_check
      _
    $region23: #{tpu_custom_call.1} parent=1 // pred_check_branch
      %60 = sbr.rel (0) target = $region25
    $region24: #{tpu_custom_call.1} parent=1 // pred_region
      %s62 = ssub.s32 192, 192
      %63 = vsyncadd [#allocation9], %s62
      %s65 = sshll.u32 [#allocation8], 4
      %s66 = int_to_ptr.vmem [resolvable:$true] %s65
      %68 = dma.vmem_to_hbm [thread:$0]  %s66, 192, %s3, [#allocation9]
    $region25: #{tpu_custom_call.1} parent=1 // pred_fallthru
      _
    // Predicated region
    $region26: #{tpu_custom_call.1} parent=1 // pred_check
      _
    $region27: #{tpu_custom_call.1} parent=1 // pred_check_branch
      %70 = sbr.rel (0) target = $region29
    $region28: #{tpu_custom_call.1} parent=1 // pred_region
      %71 = dma.done [#allocation4], 64
    $region29: #{tpu_custom_call.1} parent=1 // pred_fallthru
      _
    // Predicated region
    $region30: #{tpu_custom_call.1} parent=1 // pred_check
      _
    $region31: #{tpu_custom_call.1} parent=1 // pred_check_branch
      %73 = sbr.rel (0) target = $region33
    $region32: #{tpu_custom_call.1} parent=1 // pred_region
      %74 = dma.done [#allocation9], 192
    $region33: #{tpu_custom_call.1} parent=1 // pred_fallthru
      _
    %75 = vsyncpa [#allocation3], 1
    %76 = vsyncpa [#allocation6], 1
    %77 = vsyncpa [#allocation4], 1
    %78 = vsyncpa [#allocation9], 1

</llo_original>
